<compile_context>
chip_gen: v5e
topology: v5e:2x2
jax: 0.10.0
libtpu: 0.0.40
codegen_flags: <defaults>
</compile_context>

<pallas_src>
import jax
import jax.numpy as jnp
from jax.experimental import pallas as pl
from jax.experimental.pallas import tpu as pltpu

LANE = 128  # TPU lane width; hidden feature dims are zero-padded to this.


def _round_up(x, m):
    return (x + m - 1) // m * m


def hidden_nn_kernel(x_ref,
                     w1_ref, t1_ref,
                     w2_ref, t2_ref,
                     w3_ref, t3_ref,
                     w4_ref, t4_ref,
                     w5_ref, t5_ref,
                     w6_ref, t6_ref,
                     w7_ref, t7_ref,
                     o_ref):
    """Fused 7-layer MLP: layers 1-6 are relu(h @ W' + t) (Linear + folded
    BN(eval) + ReLU), layer 7 is h @ W7 + b7. bf16 MXU operands, f32
    accumulate, f32 elementwise (bias-add / ReLU)."""
    h = x_ref[...]  # already bf16, natural in_dim width (no lane padding)

    def lbr(h, w_ref, t_ref):
        z = jnp.dot(h, w_ref[...], preferred_element_type=jnp.float32)
        z = jnp.maximum(z + t_ref[...], 0.0)
        return z.astype(jnp.bfloat16)  # cast only the next dot's operand

    h = lbr(h, w1_ref, t1_ref)
    h = lbr(h, w2_ref, t2_ref)
    h = lbr(h, w3_ref, t3_ref)
    h = lbr(h, w4_ref, t4_ref)
    h = lbr(h, w5_ref, t5_ref)
    h = lbr(h, w6_ref, t6_ref)

    z = jnp.dot(h, w7_ref[...], preferred_element_type=jnp.float32)
    o_ref[...] = (z + t7_ref[...]).astype(o_ref.dtype)


def make_params(key, in_dim, out_dim, eps=1e-5):
    """Deterministic init; BN(eval) gamma/beta/mean/var folded into (W, shift)."""
    dims = [(in_dim, in_dim), (in_dim, in_dim), (in_dim, out_dim),
            (out_dim, out_dim), (out_dim, out_dim), (out_dim, out_dim),
            (out_dim, out_dim)]
    params = []
    for li, (di, do) in enumerate(dims):
        key, kw, kb, kg, kbe, km, kv = jax.random.split(key, 7)
        bound = 1.0 / jnp.sqrt(jnp.float32(di))
        w = jax.random.uniform(kw, (di, do), jnp.float32, -bound, bound)
        b = jax.random.uniform(kb, (do,), jnp.float32, -bound, bound)
        if li < 6:
            gamma = 1.0 + 0.1 * jax.random.normal(kg, (do,), jnp.float32)
            beta = 0.1 * jax.random.normal(kbe, (do,), jnp.float32)
            run_mean = 0.1 * jax.random.normal(km, (do,), jnp.float32)
            run_var = jnp.abs(1.0 + 0.1 * jax.random.normal(kv, (do,), jnp.float32))
            # BN(eval) on z = x@W + b: gamma*(z-mean)/sqrt(var+eps) + beta
            scale = gamma / jnp.sqrt(run_var + eps)
            w = w * scale[None, :]                 # fold scale into weights
            t = scale * (b - run_mean) + beta
        else:
            t = b                                   # plain Linear (layer 7)
        params.append((w, t))
    return params


def prepare_padded_params(params):
    """One-time (hoisted out of the forward): zero-pad each (W, t) to lane
    width and cast weights to bf16. Layer-1 W keeps its natural K dim since x
    is fed at natural feature width."""
    padded = []
    for li, (w, t) in enumerate(params):
        di, do = w.shape
        kdim = di if li == 0 else LANE
        wp = jnp.zeros((kdim, LANE), jnp.float32).at[:di, :do].set(w)
        tp = jnp.zeros((1, LANE), jnp.float32).at[0, :do].set(t)
        padded.append((wp.astype(jnp.bfloat16), tp))
    return jax.block_until_ready(padded)


def _choose_tile_b(b_pad, max_tile=1024, overhead_rows=256):
    """Pick a batch tile (multiple of 8, <= max_tile) that minimizes
    padded-rows + grid-step overhead, and yields >= 2 blocks when possible so
    v7x's second TensorCore gets work."""
    if b_pad <= 8:
        return b_pad
    cap = max(8, min(max_tile, b_pad - 8))   # tb < b_pad  =>  >= 2 blocks
    best_tb, best_cost = 8, None
    for tb in range(8, cap + 1, 8):
        padded = _round_up(b_pad, tb)
        cost = padded + (padded // tb) * overhead_rows
        if best_cost is None or cost <= best_cost:
            best_tb, best_cost = tb, cost
    return best_tb


def hidden_nn_forward(x, padded_params, out_dim, *, max_tile_b=1024):
    B, in_dim = x.shape
    assert in_dim <= LANE and out_dim <= LANE, "padding scheme assumes dims <= 128"

    b_pad = _round_up(B, 8)
    tb = _choose_tile_b(b_pad, max_tile_b)
    b_pad = _round_up(b_pad, tb)

    # Pad only the batch dim; keep the feature dim at its natural width and
    # cast to bf16 -> smallest possible input HBM stream.
    xp = jnp.zeros((b_pad, in_dim), jnp.bfloat16).at[:B].set(x.astype(jnp.bfloat16))

    flat = [xp]
    in_specs = [pl.BlockSpec((tb, in_dim), lambda i: (i, 0))]
    for w, t in padded_params:
        flat.extend([w, t])
        in_specs.append(pl.BlockSpec(w.shape, lambda i: (0, 0)))      # VMEM-resident
        in_specs.append(pl.BlockSpec((1, LANE), lambda i: (0, 0)))    # VMEM-resident

    out = pl.pallas_call(
        hidden_nn_kernel,
        out_shape=jax.ShapeDtypeStruct((b_pad, LANE), jnp.float32),
        grid=(b_pad // tb,),
        in_specs=in_specs,
        out_specs=pl.BlockSpec((tb, LANE), lambda i: (i, 0)),
        compiler_params=pltpu.CompilerParams(
            dimension_semantics=("parallel",)),
    )(*flat)
    return out[:B, :out_dim]


def hidden_nn_reference(x, params):
    """Pure-JAX reference with matching bf16-matmul / f32-accumulate semantics."""
    h = x
    for li, (w, t) in enumerate(params):
        z = jnp.dot(h.astype(jnp.bfloat16), w.astype(jnp.bfloat16),
                    preferred_element_type=jnp.float32) + t
        h = jnp.maximum(z, 0.0) if li < 6 else z
    return h


if __name__ == "__main__":
    # TODO(synk): Dropout is identity (eval-mode semantics); BatchNorm1d uses
    # running stats folded into the weights (eval mode), not batch statistics.
    B, in_dim, out_dim = 8, 32, 64
    key = jax.random.PRNGKey(0)
    kx, kp = jax.random.split(key)
    x = jax.random.normal(kx, (B, in_dim), jnp.float32)

    params = make_params(kp, in_dim, out_dim)
    padded_params = prepare_padded_params(params)   # hoisted one-time prep

    out = hidden_nn_forward(x, padded_params, out_dim)
    out = jax.block_until_ready(out)

    ref = hidden_nn_reference(x, params)
    assert out.shape == (B, out_dim)
    assert jnp.allclose(out, ref, atol=1e-2, rtol=1e-2), "mismatch vs reference"
    print("KERNEL_OK")
</pallas_src>

<mosaic_0001>
module attributes {stable_mosaic.version = 11 : i64} {
  func.func @hidden_nn_kernel(%arg0: i32, %arg1: memref<8x32xbf16, #tpu.memory_space<vmem>>, %arg2: memref<32x128xbf16, #tpu.memory_space<vmem>>, %arg3: memref<1x128xf32, #tpu.memory_space<vmem>>, %arg4: memref<128x128xbf16, #tpu.memory_space<vmem>>, %arg5: memref<1x128xf32, #tpu.memory_space<vmem>>, %arg6: memref<128x128xbf16, #tpu.memory_space<vmem>>, %arg7: memref<1x128xf32, #tpu.memory_space<vmem>>, %arg8: memref<128x128xbf16, #tpu.memory_space<vmem>>, %arg9: memref<1x128xf32, #tpu.memory_space<vmem>>, %arg10: memref<128x128xbf16, #tpu.memory_space<vmem>>, %arg11: memref<1x128xf32, #tpu.memory_space<vmem>>, %arg12: memref<128x128xbf16, #tpu.memory_space<vmem>>, %arg13: memref<1x128xf32, #tpu.memory_space<vmem>>, %arg14: memref<128x128xbf16, #tpu.memory_space<vmem>>, %arg15: memref<1x128xf32, #tpu.memory_space<vmem>>, %arg16: memref<8x128xf32, #tpu.memory_space<vmem>>) attributes {dimension_semantics = [#tpu.dimension_semantics<parallel>], iteration_bounds = array<i64: 1>, scalar_prefetch = 0 : i64, scratch_operands = 0 : i64, tpu.core_type = #tpu.core_type<tc>, window_params = [{transform_indices = @transform_0, window_bounds = array<i64: 8, 32>}, {pipeline_mode = #tpu.pipeline_mode<synchronous>, transform_indices = @transform_1, window_bounds = array<i64: 32, 128>}, {pipeline_mode = #tpu.pipeline_mode<synchronous>, transform_indices = @transform_2, window_bounds = array<i64: 1, 128>}, {pipeline_mode = #tpu.pipeline_mode<synchronous>, transform_indices = @transform_3, window_bounds = array<i64: 128, 128>}, {pipeline_mode = #tpu.pipeline_mode<synchronous>, transform_indices = @transform_4, window_bounds = array<i64: 1, 128>}, {pipeline_mode = #tpu.pipeline_mode<synchronous>, transform_indices = @transform_5, window_bounds = array<i64: 128, 128>}, {pipeline_mode = #tpu.pipeline_mode<synchronous>, transform_indices = @transform_6, window_bounds = array<i64: 1, 128>}, {pipeline_mode = #tpu.pipeline_mode<synchronous>, transform_indices = @transform_7, window_bounds = array<i64: 128, 128>}, {pipeline_mode = #tpu.pipeline_mode<synchronous>, transform_indices = @transform_8, window_bounds = array<i64: 1, 128>}, {pipeline_mode = #tpu.pipeline_mode<synchronous>, transform_indices = @transform_9, window_bounds = array<i64: 128, 128>}, {pipeline_mode = #tpu.pipeline_mode<synchronous>, transform_indices = @transform_10, window_bounds = array<i64: 1, 128>}, {pipeline_mode = #tpu.pipeline_mode<synchronous>, transform_indices = @transform_11, window_bounds = array<i64: 128, 128>}, {pipeline_mode = #tpu.pipeline_mode<synchronous>, transform_indices = @transform_12, window_bounds = array<i64: 1, 128>}, {pipeline_mode = #tpu.pipeline_mode<synchronous>, transform_indices = @transform_13, window_bounds = array<i64: 128, 128>}, {pipeline_mode = #tpu.pipeline_mode<synchronous>, transform_indices = @transform_14, window_bounds = array<i64: 1, 128>}, {transform_indices = @transform_15, window_bounds = array<i64: 8, 128>}]} {
    %c0 = arith.constant 0 : index
    %c0_0 = arith.constant 0 : index
    %0 = vector.load %arg1[%c0, %c0_0] : memref<8x32xbf16, #tpu.memory_space<vmem>>, vector<8x32xbf16>
    %c0_1 = arith.constant 0 : index
    %c0_2 = arith.constant 0 : index
    %1 = vector.load %arg2[%c0_1, %c0_2] : memref<32x128xbf16, #tpu.memory_space<vmem>>, vector<32x128xbf16>
    %cst = arith.constant dense<0.000000e+00> : vector<8x128xf32>
    %2 = tpu.matmul %0, %1, %cst {dimension_numbers = #tpu.dot_dimension_numbers<[1], [0], [0], [1], [0, 0, 1, 1], [], []>} : vector<8x32xbf16>, vector<32x128xbf16>, vector<8x128xf32> -> vector<8x128xf32>
    %c0_3 = arith.constant 0 : index
    %c0_4 = arith.constant 0 : index
    %3 = vector.load %arg3[%c0_3, %c0_4] : memref<1x128xf32, #tpu.memory_space<vmem>>, vector<1x128xf32>
    %4 = vector.broadcast %3 : vector<1x128xf32> to vector<8x128xf32>
    %5 = arith.addf %2, %4 : vector<8x128xf32>
    %cst_5 = arith.constant 0.000000e+00 : f32
    %6 = vector.broadcast %cst_5 : f32 to vector<8x128xf32>
    %7 = arith.maximumf %5, %6 : vector<8x128xf32>
    %8 = arith.truncf %7 : vector<8x128xf32> to vector<8x128xbf16>
    %c0_6 = arith.constant 0 : index
    %c0_7 = arith.constant 0 : index
    %9 = vector.load %arg4[%c0_6, %c0_7] : memref<128x128xbf16, #tpu.memory_space<vmem>>, vector<128x128xbf16>
    %cst_8 = arith.constant dense<0.000000e+00> : vector<8x128xf32>
    %10 = tpu.matmul %8, %9, %cst_8 {dimension_numbers = #tpu.dot_dimension_numbers<[1], [0], [0], [1], [0, 0, 1, 1], [], []>} : vector<8x128xbf16>, vector<128x128xbf16>, vector<8x128xf32> -> vector<8x128xf32>
    %c0_9 = arith.constant 0 : index
    %c0_10 = arith.constant 0 : index
    %11 = vector.load %arg5[%c0_9, %c0_10] : memref<1x128xf32, #tpu.memory_space<vmem>>, vector<1x128xf32>
    %12 = vector.broadcast %11 : vector<1x128xf32> to vector<8x128xf32>
    %13 = arith.addf %10, %12 : vector<8x128xf32>
    %cst_11 = arith.constant 0.000000e+00 : f32
    %14 = vector.broadcast %cst_11 : f32 to vector<8x128xf32>
    %15 = arith.maximumf %13, %14 : vector<8x128xf32>
    %16 = arith.truncf %15 : vector<8x128xf32> to vector<8x128xbf16>
    %c0_12 = arith.constant 0 : index
    %c0_13 = arith.constant 0 : index
    %17 = vector.load %arg6[%c0_12, %c0_13] : memref<128x128xbf16, #tpu.memory_space<vmem>>, vector<128x128xbf16>
    %cst_14 = arith.constant dense<0.000000e+00> : vector<8x128xf32>
    %18 = tpu.matmul %16, %17, %cst_14 {dimension_numbers = #tpu.dot_dimension_numbers<[1], [0], [0], [1], [0, 0, 1, 1], [], []>} : vector<8x128xbf16>, vector<128x128xbf16>, vector<8x128xf32> -> vector<8x128xf32>
    %c0_15 = arith.constant 0 : index
    %c0_16 = arith.constant 0 : index
    %19 = vector.load %arg7[%c0_15, %c0_16] : memref<1x128xf32, #tpu.memory_space<vmem>>, vector<1x128xf32>
    %20 = vector.broadcast %19 : vector<1x128xf32> to vector<8x128xf32>
    %21 = arith.addf %18, %20 : vector<8x128xf32>
    %cst_17 = arith.constant 0.000000e+00 : f32
    %22 = vector.broadcast %cst_17 : f32 to vector<8x128xf32>
    %23 = arith.maximumf %21, %22 : vector<8x128xf32>
    %24 = arith.truncf %23 : vector<8x128xf32> to vector<8x128xbf16>
    %c0_18 = arith.constant 0 : index
    %c0_19 = arith.constant 0 : index
    %25 = vector.load %arg8[%c0_18, %c0_19] : memref<128x128xbf16, #tpu.memory_space<vmem>>, vector<128x128xbf16>
    %cst_20 = arith.constant dense<0.000000e+00> : vector<8x128xf32>
    %26 = tpu.matmul %24, %25, %cst_20 {dimension_numbers = #tpu.dot_dimension_numbers<[1], [0], [0], [1], [0, 0, 1, 1], [], []>} : vector<8x128xbf16>, vector<128x128xbf16>, vector<8x128xf32> -> vector<8x128xf32>
    %c0_21 = arith.constant 0 : index
    %c0_22 = arith.constant 0 : index
    %27 = vector.load %arg9[%c0_21, %c0_22] : memref<1x128xf32, #tpu.memory_space<vmem>>, vector<1x128xf32>
    %28 = vector.broadcast %27 : vector<1x128xf32> to vector<8x128xf32>
    %29 = arith.addf %26, %28 : vector<8x128xf32>
    %cst_23 = arith.constant 0.000000e+00 : f32
    %30 = vector.broadcast %cst_23 : f32 to vector<8x128xf32>
    %31 = arith.maximumf %29, %30 : vector<8x128xf32>
    %32 = arith.truncf %31 : vector<8x128xf32> to vector<8x128xbf16>
    %c0_24 = arith.constant 0 : index
    %c0_25 = arith.constant 0 : index
    %33 = vector.load %arg10[%c0_24, %c0_25] : memref<128x128xbf16, #tpu.memory_space<vmem>>, vector<128x128xbf16>
    %cst_26 = arith.constant dense<0.000000e+00> : vector<8x128xf32>
    %34 = tpu.matmul %32, %33, %cst_26 {dimension_numbers = #tpu.dot_dimension_numbers<[1], [0], [0], [1], [0, 0, 1, 1], [], []>} : vector<8x128xbf16>, vector<128x128xbf16>, vector<8x128xf32> -> vector<8x128xf32>
    %c0_27 = arith.constant 0 : index
    %c0_28 = arith.constant 0 : index
    %35 = vector.load %arg11[%c0_27, %c0_28] : memref<1x128xf32, #tpu.memory_space<vmem>>, vector<1x128xf32>
    %36 = vector.broadcast %35 : vector<1x128xf32> to vector<8x128xf32>
    %37 = arith.addf %34, %36 : vector<8x128xf32>
    %cst_29 = arith.constant 0.000000e+00 : f32
    %38 = vector.broadcast %cst_29 : f32 to vector<8x128xf32>
    %39 = arith.maximumf %37, %38 : vector<8x128xf32>
    %40 = arith.truncf %39 : vector<8x128xf32> to vector<8x128xbf16>
    %c0_30 = arith.constant 0 : index
    %c0_31 = arith.constant 0 : index
    %41 = vector.load %arg12[%c0_30, %c0_31] : memref<128x128xbf16, #tpu.memory_space<vmem>>, vector<128x128xbf16>
    %cst_32 = arith.constant dense<0.000000e+00> : vector<8x128xf32>
    %42 = tpu.matmul %40, %41, %cst_32 {dimension_numbers = #tpu.dot_dimension_numbers<[1], [0], [0], [1], [0, 0, 1, 1], [], []>} : vector<8x128xbf16>, vector<128x128xbf16>, vector<8x128xf32> -> vector<8x128xf32>
    %c0_33 = arith.constant 0 : index
    %c0_34 = arith.constant 0 : index
    %43 = vector.load %arg13[%c0_33, %c0_34] : memref<1x128xf32, #tpu.memory_space<vmem>>, vector<1x128xf32>
    %44 = vector.broadcast %43 : vector<1x128xf32> to vector<8x128xf32>
    %45 = arith.addf %42, %44 : vector<8x128xf32>
    %cst_35 = arith.constant 0.000000e+00 : f32
    %46 = vector.broadcast %cst_35 : f32 to vector<8x128xf32>
    %47 = arith.maximumf %45, %46 : vector<8x128xf32>
    %48 = arith.truncf %47 : vector<8x128xf32> to vector<8x128xbf16>
    %c0_36 = arith.constant 0 : index
    %c0_37 = arith.constant 0 : index
    %49 = vector.load %arg14[%c0_36, %c0_37] : memref<128x128xbf16, #tpu.memory_space<vmem>>, vector<128x128xbf16>
    %cst_38 = arith.constant dense<0.000000e+00> : vector<8x128xf32>
    %50 = tpu.matmul %48, %49, %cst_38 {dimension_numbers = #tpu.dot_dimension_numbers<[1], [0], [0], [1], [0, 0, 1, 1], [], []>} : vector<8x128xbf16>, vector<128x128xbf16>, vector<8x128xf32> -> vector<8x128xf32>
    %c0_39 = arith.constant 0 : index
    %c0_40 = arith.constant 0 : index
    %51 = vector.load %arg15[%c0_39, %c0_40] : memref<1x128xf32, #tpu.memory_space<vmem>>, vector<1x128xf32>
    %52 = vector.broadcast %51 : vector<1x128xf32> to vector<8x128xf32>
    %53 = arith.addf %50, %52 : vector<8x128xf32>
    %c0_41 = arith.constant 0 : index
    %c0_42 = arith.constant 0 : index
    %54 = vector.load %arg16[%c0_41, %c0_42] : memref<8x128xf32, #tpu.memory_space<vmem>>, vector<8x128xf32>
    tpu.vector_store %arg16[%c0_41, %c0_42], %53 {strides = array<i32>} : memref<8x128xf32, #tpu.memory_space<vmem>>, vector<8x128xf32>,
    return
  }
  func.func @transform_0(%arg0: i32) -> (i32, i32) {
    %c0_i32 = arith.constant 0 : i32
    %c0_i32_0 = arith.constant 0 : i32
    return %arg0, %c0_i32 : i32, i32
  }
  func.func @transform_1(%arg0: i32) -> (i32, i32) {
    %c0_i32 = arith.constant 0 : i32
    %c0_i32_0 = arith.constant 0 : i32
    %c0_i32_1 = arith.constant 0 : i32
    return %c0_i32, %c0_i32_0 : i32, i32
  }
  func.func @transform_2(%arg0: i32) -> (i32, i32) {
    %c0_i32 = arith.constant 0 : i32
    %c0_i32_0 = arith.constant 0 : i32
    %c0_i32_1 = arith.constant 0 : i32
    return %c0_i32, %c0_i32_0 : i32, i32
  }
  func.func @transform_3(%arg0: i32) -> (i32, i32) {
    %c0_i32 = arith.constant 0 : i32
    %c0_i32_0 = arith.constant 0 : i32
    %c0_i32_1 = arith.constant 0 : i32
    return %c0_i32, %c0_i32_0 : i32, i32
  }
  func.func @transform_4(%arg0: i32) -> (i32, i32) {
    %c0_i32 = arith.constant 0 : i32
    %c0_i32_0 = arith.constant 0 : i32
    %c0_i32_1 = arith.constant 0 : i32
    return %c0_i32, %c0_i32_0 : i32, i32
  }
  func.func @transform_5(%arg0: i32) -> (i32, i32) {
    %c0_i32 = arith.constant 0 : i32
    %c0_i32_0 = arith.constant 0 : i32
    %c0_i32_1 = arith.constant 0 : i32
    return %c0_i32, %c0_i32_0 : i32, i32
  }
  func.func @transform_6(%arg0: i32) -> (i32, i32) {
    %c0_i32 = arith.constant 0 : i32
    %c0_i32_0 = arith.constant 0 : i32
    %c0_i32_1 = arith.constant 0 : i32
    return %c0_i32, %c0_i32_0 : i32, i32
  }
  func.func @transform_7(%arg0: i32) -> (i32, i32) {
    %c0_i32 = arith.constant 0 : i32
    %c0_i32_0 = arith.constant 0 : i32
    %c0_i32_1 = arith.constant 0 : i32
    return %c0_i32, %c0_i32_0 : i32, i32
  }
  func.func @transform_8(%arg0: i32) -> (i32, i32) {
    %c0_i32 = arith.constant 0 : i32
    %c0_i32_0 = arith.constant 0 : i32
    %c0_i32_1 = arith.constant 0 : i32
    return %c0_i32, %c0_i32_0 : i32, i32
  }
  func.func @transform_9(%arg0: i32) -> (i32, i32) {
    %c0_i32 = arith.constant 0 : i32
    %c0_i32_0 = arith.constant 0 : i32
    %c0_i32_1 = arith.constant 0 : i32
    return %c0_i32, %c0_i32_0 : i32, i32
  }
  func.func @transform_10(%arg0: i32) -> (i32, i32) {
    %c0_i32 = arith.constant 0 : i32
    %c0_i32_0 = arith.constant 0 : i32
    %c0_i32_1 = arith.constant 0 : i32
    return %c0_i32, %c0_i32_0 : i32, i32
  }
  func.func @transform_11(%arg0: i32) -> (i32, i32) {
    %c0_i32 = arith.constant 0 : i32
    %c0_i32_0 = arith.constant 0 : i32
    %c0_i32_1 = arith.constant 0 : i32
    return %c0_i32, %c0_i32_0 : i32, i32
  }
  func.func @transform_12(%arg0: i32) -> (i32, i32) {
    %c0_i32 = arith.constant 0 : i32
    %c0_i32_0 = arith.constant 0 : i32
    %c0_i32_1 = arith.constant 0 : i32
    return %c0_i32, %c0_i32_0 : i32, i32
  }
  func.func @transform_13(%arg0: i32) -> (i32, i32) {
    %c0_i32 = arith.constant 0 : i32
    %c0_i32_0 = arith.constant 0 : i32
    %c0_i32_1 = arith.constant 0 : i32
    return %c0_i32, %c0_i32_0 : i32, i32
  }
  func.func @transform_14(%arg0: i32) -> (i32, i32) {
    %c0_i32 = arith.constant 0 : i32
    %c0_i32_0 = arith.constant 0 : i32
    %c0_i32_1 = arith.constant 0 : i32
    return %c0_i32, %c0_i32_0 : i32, i32
  }
  func.func @transform_15(%arg0: i32) -> (i32, i32) {
    %c0_i32 = arith.constant 0 : i32
    %c0_i32_0 = arith.constant 0 : i32
    return %arg0, %c0_i32 : i32, i32
  }
}

</mosaic_0001>

<llo_original>
// kernel: tpu_custom_call.1
$region0: #{tpu_custom_call.1}
  #allocation0 [shape = 'u32[]', space=smem, size = 0x4, offset = 0x4, fixed_abs, tag = 'smem constant byte address 0x4 - core index']
  #allocation1 [shape = 'u32[72,128]{1,0:T(1,128)}', space=vmem, size = 0x9000, scoped, tag = 'internal scratch']
  %s0 = inlined_call_operand.hbm [shape: bf16[8,32], index: 0, kind: input, shape index: {}]
  %s1 = inlined_call_operand.hbm [shape: bf16[32,128], index: 1, kind: input, shape index: {}]
  %s2 = inlined_call_operand.vmem [shape: f32[1,128], index: 2, kind: input, shape index: {}]
  %s3 = inlined_call_operand.hbm [shape: bf16[128,128], index: 3, kind: input, shape index: {}]
  %s4 = inlined_call_operand.vmem [shape: f32[1,128], index: 4, kind: input, shape index: {}]
  %s5 = inlined_call_operand.hbm [shape: bf16[128,128], index: 5, kind: input, shape index: {}]
  %s6 = inlined_call_operand.vmem [shape: f32[1,128], index: 6, kind: input, shape index: {}]
  %s7 = inlined_call_operand.hbm [shape: bf16[128,128], index: 7, kind: input, shape index: {}]
  %s8 = inlined_call_operand.vmem [shape: f32[1,128], index: 8, kind: input, shape index: {}]
  %s9 = inlined_call_operand.hbm [shape: bf16[128,128], index: 9, kind: input, shape index: {}]
  %s10 = inlined_call_operand.vmem [shape: f32[1,128], index: 10, kind: input, shape index: {}]
  %s11 = inlined_call_operand.hbm [shape: bf16[128,128], index: 11, kind: input, shape index: {}]
  %s12 = inlined_call_operand.vmem [shape: f32[1,128], index: 12, kind: input, shape index: {}]
  %s13 = inlined_call_operand.hbm [shape: bf16[128,128], index: 13, kind: input, shape index: {}]
  %s14 = inlined_call_operand.vmem [shape: f32[1,128], index: 14, kind: input, shape index: {}]
  %s15 = inlined_call_operand.hbm [shape: f32[8,128], index: 15, kind: output, shape index: {}]
  %s16 = sld [smem:[#allocation0]]
  $region102: #{tpu_custom_call.1} parent=0
    _
  %s18 = ssub.s32 1, %s16
  %s19 = scalar_select 0, %s18, %s16
  $region1: #{tpu_custom_call.1} parent=0
    #allocation2 [shape = 'u8[2048]{0}', space=vmem, size = 0x800, scoped, tag = 'input window, operand 0, single buffered']
    #allocation3 [shape = 's32[1]{0}', space=sflag, size = 0x4, scoped, tag = 'scoped memory for tpu_custom_call.1']
    #allocation4 [shape = 's32[1]{0}', space=sflag, size = 0x4, scoped, tag = 'scoped memory for tpu_custom_call.1']
    #allocation5 [shape = 'u8[8192]{0}', space=vmem, size = 0x2000, scoped, tag = 'input window, operand 1, single buffered']
    #allocation6 [shape = 's32[1]{0}', space=sflag, size = 0x4, scoped, tag = 'scoped memory for tpu_custom_call.1']
    #allocation7 [shape = 'u8[32768]{0}', space=vmem, size = 0x8000, scoped, tag = 'input window, operand 3, single buffered']
    #allocation8 [shape = 'u8[32768]{0}', space=vmem, size = 0x8000, scoped, tag = 'input window, operand 5, single buffered']
    #allocation9 [shape = 's32[1]{0}', space=sflag, size = 0x4, scoped, tag = 'scoped memory for tpu_custom_call.1']
    #allocation10 [shape = 'u8[32768]{0}', space=vmem, size = 0x8000, scoped, tag = 'input window, operand 7, single buffered']
    #allocation11 [shape = 'u8[32768]{0}', space=vmem, size = 0x8000, scoped, tag = 'input window, operand 9, single buffered']
    #allocation12 [shape = 's32[1]{0}', space=sflag, size = 0x4, scoped, tag = 'scoped memory for tpu_custom_call.1']
    #allocation13 [shape = 'u8[32768]{0}', space=vmem, size = 0x8000, scoped, tag = 'input window, operand 11, single buffered']
    #allocation14 [shape = 'u8[32768]{0}', space=vmem, size = 0x8000, scoped, tag = 'input window, operand 13, single buffered']
    #allocation15 [shape = 's32[1]{0}', space=sflag, size = 0x4, scoped, tag = 'scoped memory for tpu_custom_call.1']
    #allocation16 [shape = 'u8[4096]{0}', space=vmem, size = 0x1000, scoped, tag = 'output window, operand 0, single buffered']
    %20 = vsyncpa [#allocation3], 0
    %21 = vsyncpa [#allocation6], 0
    %22 = vsyncpa [#allocation9], 0
    %23 = vsyncpa [#allocation12], 0
    %24 = vsyncpa [#allocation15], 0
    %25 = vsyncpa [#allocation4], 0
    // Predicated region
    $region2: #{tpu_custom_call.1} parent=1 // pred_check
      _
    $region3: #{tpu_custom_call.1} parent=1 // pred_check_branch
      %27 = sbr.rel (0) target = $region5
    $region4: #{tpu_custom_call.1} parent=1 // pred_region
      %29 = vsyncadd [#allocation3], 0
      %s31 = sshll.u32 %s0, 4
      %s32 = int_to_ptr.hbm [resolvable:$true] %s31
      %s33 = sshll.u32 [#allocation2], 4
      %s34 = int_to_ptr.vmem [resolvable:$true] %s33
      %36 = dma.hbm_to_vmem [thread:$0]  %s32, 64, %s34, [#allocation3]
    $region5: #{tpu_custom_call.1} parent=1 // pred_fallthru
      _
    // Predicated region
    $region6: #{tpu_custom_call.1} parent=1 // pred_check
      _
    $region7: #{tpu_custom_call.1} parent=1 // pred_check_branch
      %38 = sbr.rel (0) target = $region9
    $region8: #{tpu_custom_call.1} parent=1 // pred_region
      %40 = vsyncadd [#allocation6], 0
      %s41 = sshll.u32 %s1, 4
      %s42 = int_to_ptr.hbm [resolvable:$true] %s41
      %s43 = sshll.u32 [#allocation5], 4
      %s44 = int_to_ptr.vmem [resolvable:$true] %s43
      %49 = dma.hbm_to_vmem [thread:$0]  %s42, 256, %s44, [#allocation6], 64, 64, 4
    $region9: #{tpu_custom_call.1} parent=1 // pred_fallthru
      _
    // Predicated region
    $region10: #{tpu_custom_call.1} parent=1 // pred_check
      _
    $region11: #{tpu_custom_call.1} parent=1 // pred_check_branch
      %51 = sbr.rel (0) target = $region13
    $region12: #{tpu_custom_call.1} parent=1 // pred_region
      _
    $region13: #{tpu_custom_call.1} parent=1 // pred_fallthru
      _
    // Predicated region
    $region14: #{tpu_custom_call.1} parent=1 // pred_check
      _
    $region15: #{tpu_custom_call.1} parent=1 // pred_check_branch
      %53 = sbr.rel (0) target = $region17
    $region16: #{tpu_custom_call.1} parent=1 // pred_region
      %55 = vsyncadd [#allocation6], 0
      %s56 = sshll.u32 %s3, 4
      %s57 = int_to_ptr.hbm [resolvable:$true] %s56
      %s58 = sshll.u32 [#allocation7], 4
      %s59 = int_to_ptr.vmem [resolvable:$true] %s58
      %64 = dma.hbm_to_vmem [thread:$0]  %s57, 1024, %s59, [#allocation6], 64, 64, 4
    $region17: #{tpu_custom_call.1} parent=1 // pred_fallthru
      _
    // Predicated region
    $region18: #{tpu_custom_call.1} parent=1 // pred_check
      _
    $region19: #{tpu_custom_call.1} parent=1 // pred_check_branch
      %66 = sbr.rel (0) target = $region21
    $region20: #{tpu_custom_call.1} parent=1 // pred_region
      _
    $region21: #{tpu_custom_call.1} parent=1 // pred_fallthru
      _
    // Predicated region
    $region22: #{tpu_custom_call.1} parent=1 // pred_check
      _
    $region23: #{tpu_custom_call.1} parent=1 // pred_check_branch
      %68 = sbr.rel (0) target = $region25
    $region24: #{tpu_custom_call.1} parent=1 // pred_region
      %70 = vsyncadd [#allocation9], 0
      %s71 = sshll.u32 %s5, 4
      %s72 = int_to_ptr.hbm [resolvable:$true] %s71
      %s73 = sshll.u32 [#allocation8], 4
      %s74 = int_to_ptr.vmem [resolvable:$true] %s73
      %79 = dma.hbm_to_vmem [thread:$0]  %s72, 1024, %s74, [#allocation9], 64, 64, 4
    $region25: #{tpu_custom_call.1} parent=1 // pred_fallthru
      _
    // Predicated region
    $region26: #{tpu_custom_call.1} parent=1 // pred_check
      _
    $region27: #{tpu_custom_call.1} parent=1 // pred_check_branch
      %81 = sbr.rel (0) target = $region29
    $region28: #{tpu_custom_call.1} parent=1 // pred_region
      _
    $region29: #{tpu_custom_call.1} parent=1 // pred_fallthru
      _
    // Predicated region
    $region30: #{tpu_custom_call.1} parent=1 // pred_check
      _
    $region31: #{tpu_custom_call.1} parent=1 // pred_check_branch
      %83 = sbr.rel (0) target = $region33
    $region32: #{tpu_custom_call.1} parent=1 // pred_region
      %85 = vsyncadd [#allocation9], 0
      %s86 = sshll.u32 %s7, 4
      %s87 = int_to_ptr.hbm [resolvable:$true] %s86
      %s88 = sshll.u32 [#allocation10], 4
      %s89 = int_to_ptr.vmem [resolvable:$true] %s88
      %94 = dma.hbm_to_vmem [thread:$0]  %s87, 1024, %s89, [#allocation9], 64, 64, 4
    $region33: #{tpu_custom_call.1} parent=1 // pred_fallthru
      _
    // Predicated region
    $region34: #{tpu_custom_call.1} parent=1 // pred_check
      _
    $region35: #{tpu_custom_call.1} parent=1 // pred_check_branch
      %96 = sbr.rel (0) target = $region37
    $region36: #{tpu_custom_call.1} parent=1 // pred_region
      _
    $region37: #{tpu_custom_call.1} parent=1 // pred_fallthru
      _
    // Predicated region
    $region38: #{tpu_custom_call.1} parent=1 // pred_check
      _
    $region39: #{tpu_custom_call.1} parent=1 // pred_check_branch
      %98 = sbr.rel (0) target = $region41
    $region40: #{tpu_custom_call.1} parent=1 // pred_region
      %100 = vsyncadd [#allocation12], 0
      %s101 = sshll.u32 %s9, 4
      %s102 = int_to_ptr.hbm [resolvable:$true] %s101
      %s103 = sshll.u32 [#allocation11], 4
      %s104 = int_to_ptr.vmem [resolvable:$true] %s103
      %109 = dma.hbm_to_vmem [thread:$0]  %s102, 1024, %s104, [#allocation12], 64, 64, 4
    $region41: #{tpu_custom_call.1} parent=1 // pred_fallthru
      _
    // Predicated region
    $region42: #{tpu_custom_call.1} parent=1 // pred_check
      _
    $region43: #{tpu_custom_call.1} parent=1 // pred_check_branch
      %111 = sbr.rel (0) target = $region45
    $region44: #{tpu_custom_call.1} parent=1 // pred_region
      _
    $region45: #{tpu_custom_call.1} parent=1 // pred_fallthru
      _
    // Predicated region
    $region46: #{tpu_custom_call.1} parent=1 // pred_check
      _
    $region47: #{tpu_custom_call.1} parent=1 // pred_check_branch
      %113 = sbr.rel (0) target = $region49
    $region48: #{tpu_custom_call.1} parent=1 // pred_region
      %115 = vsyncadd [#allocation12], 0
      %s116 = sshll.u32 %s11, 4
      %s117 = int_to_ptr.hbm [resolvable:$true] %s116
      %s118 = sshll.u32 [#allocation13], 4
      %s119 = int_to_ptr.vmem [resolvable:$true] %s118
      %124 = dma.hbm_to_vmem [thread:$0]  %s117, 1024, %s119, [#allocation12], 64, 64, 4
    $region49: #{tpu_custom_call.1} parent=1 // pred_fallthru
      _
    // Predicated region
    $region50: #{tpu_custom_call.1} parent=1 // pred_check
      _
    $region51: #{tpu_custom_call.1} parent=1 // pred_check_branch
      %126 = sbr.rel (0) target = $region53
    $region52: #{tpu_custom_call.1} parent=1 // pred_region
      _
    $region53: #{tpu_custom_call.1} parent=1 // pred_fallthru
      _
    // Predicated region
    $region54: #{tpu_custom_call.1} parent=1 // pred_check
      _
    $region55: #{tpu_custom_call.1} parent=1 // pred_check_branch
      %128 = sbr.rel (0) target = $region57
    $region56: #{tpu_custom_call.1} parent=1 // pred_region
      %130 = vsyncadd [#allocation15], 0
      %s131 = sshll.u32 %s13, 4
      %s132 = int_to_ptr.hbm [resolvable:$true] %s131
      %s133 = sshll.u32 [#allocation14], 4
      %s134 = int_to_ptr.vmem [resolvable:$true] %s133
      %139 = dma.hbm_to_vmem [thread:$0]  %s132, 1024, %s134, [#allocation15], 64, 64, 4
    $region57: #{tpu_custom_call.1} parent=1 // pred_fallthru
      _
    // Predicated region
    $region58: #{tpu_custom_call.1} parent=1 // pred_check
      _
    $region59: #{tpu_custom_call.1} parent=1 // pred_check_branch
      %141 = sbr.rel (0) target = $region61
    $region60: #{tpu_custom_call.1} parent=1 // pred_region
      _
    $region61: #{tpu_custom_call.1} parent=1 // pred_fallthru
      _
    // Predicated region
    $region62: #{tpu_custom_call.1} parent=1 // pred_check
      _
    $region63: #{tpu_custom_call.1} parent=1 // pred_check_branch
      %143 = sbr.rel (0) target = $region65
    $region64: #{tpu_custom_call.1} parent=1 // pred_region
      %145 = dma.done [#allocation3], 64
    $region65: #{tpu_custom_call.1} parent=1 // pred_fallthru
      _
    // Predicated region
    $region66: #{tpu_custom_call.1} parent=1 // pred_check
      _
    $region67: #{tpu_custom_call.1} parent=1 // pred_check_branch
      %147 = sbr.rel (0) target = $region69
    $region68: #{tpu_custom_call.1} parent=1 // pred_region
      %149 = dma.done [#allocation6], 256
    $region69: #{tpu_custom_call.1} parent=1 // pred_fallthru
      _
    // Predicated region
    $region70: #{tpu_custom_call.1} parent=1 // pred_check
      _
    $region71: #{tpu_custom_call.1} parent=1 // pred_check_branch
      %151 = sbr.rel (0) target = $region73
    $region72: #{tpu_custom_call.1} parent=1 // pred_region
      %153 = dma.done [#allocation6], 1024
    $region73: #{tpu_custom_call.1} parent=1 // pred_fallthru
      _
    // Predicated region
    $region74: #{tpu_custom_call.1} parent=1 // pred_check
      _
    $region75: #{tpu_custom_call.1} parent=1 // pred_check_branch
      %155 = sbr.rel (0) target = $region77
    $region76: #{tpu_custom_call.1} parent=1 // pred_region
      %157 = dma.done [#allocation9], 1024
    $region77: #{tpu_custom_call.1} parent=1 // pred_fallthru
      _
    // Predicated region
    $region78: #{tpu_custom_call.1} parent=1 // pred_check
      _
    $region79: #{tpu_custom_call.1} parent=1 // pred_check_branch
      %159 = sbr.rel (0) target = $region81
    $region80: #{tpu_custom_call.1} parent=1 // pred_region
      %161 = dma.done [#allocation9], 1024
    $region81: #{tpu_custom_call.1} parent=1 // pred_fallthru
      _
    // Predicated region
    $region82: #{tpu_custom_call.1} parent=1 // pred_check
      _
    $region83: #{tpu_custom_call.1} parent=1 // pred_check_branch
      %163 = sbr.rel (0) target = $region85
    $region84: #{tpu_custom_call.1} parent=1 // pred_region
      %165 = dma.done [#allocation12], 1024
    $region85: #{tpu_custom_call.1} parent=1 // pred_fallthru
      _
    // Predicated region
    $region86: #{tpu_custom_call.1} parent=1 // pred_check
      _
    $region87: #{tpu_custom_call.1} parent=1 // pred_check_branch
      %167 = sbr.rel (0) target = $region89
    $region88: #{tpu_custom_call.1} parent=1 // pred_region
      %169 = dma.done [#allocation12], 1024
    $region89: #{tpu_custom_call.1} parent=1 // pred_fallthru
      _
    // Predicated region
    $region90: #{tpu_custom_call.1} parent=1 // pred_check
      _
    $region91: #{tpu_custom_call.1} parent=1 // pred_check_branch
      %171 = sbr.rel (0) target = $region93
    $region92: #{tpu_custom_call.1} parent=1 // pred_region
      %173 = dma.done [#allocation15], 1024
    $region93: #{tpu_custom_call.1} parent=1 // pred_fallthru
      _
    %v175 = vld [vmem:[#allocation2] sm:$0xf]
    %v176 = vld [vmem:[#allocation5] sm:$0xf]
    %v177 = vld [vmem:[#allocation5 + $0x4] sm:$0xf]
    %v178 = vld [vmem:[#allocation5 + $0x8] sm:$0xf]
    %v179 = vld [vmem:[#allocation5 + $0xc] sm:$0xf]
    %v180 = vld [vmem:[%s2] sm:$0x1]
    %v182 = vperm.slane %v180, 0
    %v188 = vunpack.c.l.b16 %v176
    %v189 = vunpack.c.l.b16 %v177
    %v190 = vunpack.c.l.b16 %v178
    %v191 = vunpack.c.l.b16 %v179
    %v192 = vpack.c.b16 %v189, %v188
    %v193 = vpack.c.b16 %v191, %v190
    %vm196 = vcmask 261120
    %v198 = vsel %vm196, %v175, 0
    %200 = vmatpush.bf16.msra.mxu0 0
    %201 = vmatpush.bf16.msra.mxu0 0
    %202 = vmatpush.bf16.msra.mxu0 0
    %203 = vmatpush.bf16.msra.mxu0 0
    %204 = vmatpush.bf16.msra.mxu0 0
    %205 = vmatpush.bf16.msra.mxu0 0
    %206 = vmatpush.bf16.msra.mxu0 %v193
    %207 = vmatpush.bf16.msra.mxu0 %v192
    %208 = vmatmul.bf16.gmra.mxu0 %v198
    %v209 = vpop.f32.mrf.mxu0
    %v210 = vadd.f32 %v182, %v209
    %v211 = vpop.f32.mrf.mxu0
    %212 = vdwg.mxu0
    %v213 = vmax.f32 %v210, 0.0
    %v214 = vpack.c.bf16 %v213, %v213
    %v215 = vld [vmem:[#allocation7] sm:$0xf]
    %v216 = vld [vmem:[#allocation7 + $0x4] sm:$0xf]
    %v217 = vld [vmem:[#allocation7 + $0x8] sm:$0xf]
    %v218 = vld [vmem:[#allocation7 + $0xc] sm:$0xf]
    %v219 = vld [vmem:[#allocation7 + $0x10] sm:$0xf]
    %v220 = vld [vmem:[#allocation7 + $0x14] sm:$0xf]
    %v221 = vld [vmem:[#allocation7 + $0x18] sm:$0xf]
    %v222 = vld [vmem:[#allocation7 + $0x1c] sm:$0xf]
    %v223 = vld [vmem:[#allocation7 + $0x20] sm:$0xf]
    %v224 = vld [vmem:[#allocation7 + $0x24] sm:$0xf]
    %v225 = vld [vmem:[#allocation7 + $0x28] sm:$0xf]
    %v226 = vld [vmem:[#allocation7 + $0x2c] sm:$0xf]
    %v227 = vld [vmem:[#allocation7 + $0x30] sm:$0xf]
    %v228 = vld [vmem:[#allocation7 + $0x34] sm:$0xf]
    %v229 = vld [vmem:[#allocation7 + $0x38] sm:$0xf]
    %v230 = vld [vmem:[#allocation7 + $0x3c] sm:$0xf]
    %v231 = vld [vmem:[%s4] sm:$0x1]
    %v233 = vperm.slane %v231, 0
    %v251 = vunpack.c.l.b16 %v215
    %v252 = vunpack.c.l.b16 %v216
    %v253 = vunpack.c.l.b16 %v217
    %v254 = vunpack.c.l.b16 %v218
    %v255 = vunpack.c.l.b16 %v219
    %v256 = vunpack.c.l.b16 %v220
    %v257 = vunpack.c.l.b16 %v221
    %v258 = vunpack.c.l.b16 %v222
    %v259 = vunpack.c.l.b16 %v223
    %v260 = vunpack.c.l.b16 %v224
    %v261 = vunpack.c.l.b16 %v225
    %v262 = vunpack.c.l.b16 %v226
    %v263 = vunpack.c.l.b16 %v227
    %v264 = vunpack.c.l.b16 %v228
    %v265 = vunpack.c.l.b16 %v229
    %v266 = vunpack.c.l.b16 %v230
    %v267 = vpack.c.b16 %v252, %v251
    %v268 = vpack.c.b16 %v254, %v253
    %v269 = vpack.c.b16 %v256, %v255
    %v270 = vpack.c.b16 %v258, %v257
    %v271 = vpack.c.b16 %v260, %v259
    %v272 = vpack.c.b16 %v262, %v261
    %v273 = vpack.c.b16 %v264, %v263
    %v274 = vpack.c.b16 %v266, %v265
    %283 = vmatpush.bf16.msra.mxu0 %v274
    %284 = vmatpush.bf16.msra.mxu0 %v273
    %285 = vmatpush.bf16.msra.mxu0 %v272
    %286 = vmatpush.bf16.msra.mxu0 %v271
    %287 = vmatpush.bf16.msra.mxu0 %v270
    %288 = vmatpush.bf16.msra.mxu0 %v269
    %289 = vmatpush.bf16.msra.mxu0 %v268
    %290 = vmatpush.bf16.msra.mxu0 %v267
    %291 = vmatmul.bf16.gmra.mxu0 %v214
    %v292 = vpop.f32.mrf.mxu0
    %v293 = vadd.f32 %v233, %v292
    %v294 = vpop.f32.mrf.mxu0
    %295 = vdwg.mxu0
    %v296 = vmax.f32 %v293, 0.0
    %v297 = vpack.c.bf16 %v296, %v296
    %v298 = vld [vmem:[#allocation8] sm:$0xf]
    %v299 = vld [vmem:[#allocation8 + $0x4] sm:$0xf]
    %v300 = vld [vmem:[#allocation8 + $0x8] sm:$0xf]
    %v301 = vld [vmem:[#allocation8 + $0xc] sm:$0xf]
    %v302 = vld [vmem:[#allocation8 + $0x10] sm:$0xf]
    %v303 = vld [vmem:[#allocation8 + $0x14] sm:$0xf]
    %v304 = vld [vmem:[#allocation8 + $0x18] sm:$0xf]
    %v305 = vld [vmem:[#allocation8 + $0x1c] sm:$0xf]
    %v306 = vld [vmem:[#allocation8 + $0x20] sm:$0xf]
    %v307 = vld [vmem:[#allocation8 + $0x24] sm:$0xf]
    %v308 = vld [vmem:[#allocation8 + $0x28] sm:$0xf]
    %v309 = vld [vmem:[#allocation8 + $0x2c] sm:$0xf]
    %v310 = vld [vmem:[#allocation8 + $0x30] sm:$0xf]
    %v311 = vld [vmem:[#allocation8 + $0x34] sm:$0xf]
    %v312 = vld [vmem:[#allocation8 + $0x38] sm:$0xf]
    %v313 = vld [vmem:[#allocation8 + $0x3c] sm:$0xf]
    %v314 = vld [vmem:[%s6] sm:$0x1]
    %v316 = vperm.slane %v314, 0
    %v334 = vunpack.c.l.b16 %v298
    %v335 = vunpack.c.l.b16 %v299
    %v336 = vunpack.c.l.b16 %v300
    %v337 = vunpack.c.l.b16 %v301
    %v338 = vunpack.c.l.b16 %v302
    %v339 = vunpack.c.l.b16 %v303
    %v340 = vunpack.c.l.b16 %v304
    %v341 = vunpack.c.l.b16 %v305
    %v342 = vunpack.c.l.b16 %v306
    %v343 = vunpack.c.l.b16 %v307
    %v344 = vunpack.c.l.b16 %v308
    %v345 = vunpack.c.l.b16 %v309
    %v346 = vunpack.c.l.b16 %v310
    %v347 = vunpack.c.l.b16 %v311
    %v348 = vunpack.c.l.b16 %v312
    %v349 = vunpack.c.l.b16 %v313
    %v350 = vpack.c.b16 %v335, %v334
    %v351 = vpack.c.b16 %v337, %v336
    %v352 = vpack.c.b16 %v339, %v338
    %v353 = vpack.c.b16 %v341, %v340
    %v354 = vpack.c.b16 %v343, %v342
    %v355 = vpack.c.b16 %v345, %v344
    %v356 = vpack.c.b16 %v347, %v346
    %v357 = vpack.c.b16 %v349, %v348
    %366 = vmatpush.bf16.msra.mxu0 %v357
    %367 = vmatpush.bf16.msra.mxu0 %v356
    %368 = vmatpush.bf16.msra.mxu0 %v355
    %369 = vmatpush.bf16.msra.mxu0 %v354
    %370 = vmatpush.bf16.msra.mxu0 %v353
    %371 = vmatpush.bf16.msra.mxu0 %v352
    %372 = vmatpush.bf16.msra.mxu0 %v351
    %373 = vmatpush.bf16.msra.mxu0 %v350
    %374 = vmatmul.bf16.gmra.mxu0 %v297
    %v375 = vpop.f32.mrf.mxu0
    %v376 = vadd.f32 %v316, %v375
    %v377 = vpop.f32.mrf.mxu0
    %378 = vdwg.mxu0
    %v379 = vmax.f32 %v376, 0.0
    %v380 = vpack.c.bf16 %v379, %v379
    %v381 = vld [vmem:[#allocation10] sm:$0xf]
    %v382 = vld [vmem:[#allocation10 + $0x4] sm:$0xf]
    %v383 = vld [vmem:[#allocation10 + $0x8] sm:$0xf]
    %v384 = vld [vmem:[#allocation10 + $0xc] sm:$0xf]
    %v385 = vld [vmem:[#allocation10 + $0x10] sm:$0xf]
    %v386 = vld [vmem:[#allocation10 + $0x14] sm:$0xf]
    %v387 = vld [vmem:[#allocation10 + $0x18] sm:$0xf]
    %v388 = vld [vmem:[#allocation10 + $0x1c] sm:$0xf]
    %v389 = vld [vmem:[#allocation10 + $0x20] sm:$0xf]
    %v390 = vld [vmem:[#allocation10 + $0x24] sm:$0xf]
    %v391 = vld [vmem:[#allocation10 + $0x28] sm:$0xf]
    %v392 = vld [vmem:[#allocation10 + $0x2c] sm:$0xf]
    %v393 = vld [vmem:[#allocation10 + $0x30] sm:$0xf]
    %v394 = vld [vmem:[#allocation10 + $0x34] sm:$0xf]
    %v395 = vld [vmem:[#allocation10 + $0x38] sm:$0xf]
    %v396 = vld [vmem:[#allocation10 + $0x3c] sm:$0xf]
    %v397 = vld [vmem:[%s8] sm:$0x1]
    %v399 = vperm.slane %v397, 0
    %v417 = vunpack.c.l.b16 %v381
    %v418 = vunpack.c.l.b16 %v382
    %v419 = vunpack.c.l.b16 %v383
    %v420 = vunpack.c.l.b16 %v384
    %v421 = vunpack.c.l.b16 %v385
    %v422 = vunpack.c.l.b16 %v386
    %v423 = vunpack.c.l.b16 %v387
    %v424 = vunpack.c.l.b16 %v388
    %v425 = vunpack.c.l.b16 %v389
    %v426 = vunpack.c.l.b16 %v390
    %v427 = vunpack.c.l.b16 %v391
    %v428 = vunpack.c.l.b16 %v392
    %v429 = vunpack.c.l.b16 %v393
    %v430 = vunpack.c.l.b16 %v394
    %v431 = vunpack.c.l.b16 %v395
    %v432 = vunpack.c.l.b16 %v396
    %v433 = vpack.c.b16 %v418, %v417
    %v434 = vpack.c.b16 %v420, %v419
    %v435 = vpack.c.b16 %v422, %v421
    %v436 = vpack.c.b16 %v424, %v423
    %v437 = vpack.c.b16 %v426, %v425
    %v438 = vpack.c.b16 %v428, %v427
    %v439 = vpack.c.b16 %v430, %v429
    %v440 = vpack.c.b16 %v432, %v431
    %449 = vmatpush.bf16.msra.mxu0 %v440
    %450 = vmatpush.bf16.msra.mxu0 %v439
    %451 = vmatpush.bf16.msra.mxu0 %v438
    %452 = vmatpush.bf16.msra.mxu0 %v437
    %453 = vmatpush.bf16.msra.mxu0 %v436
    %454 = vmatpush.bf16.msra.mxu0 %v435
    %455 = vmatpush.bf16.msra.mxu0 %v434
    %456 = vmatpush.bf16.msra.mxu0 %v433
    %457 = vmatmul.bf16.gmra.mxu0 %v380
    %v458 = vpop.f32.mrf.mxu0
    %v459 = vadd.f32 %v399, %v458
    %v460 = vpop.f32.mrf.mxu0
    %461 = vdwg.mxu0
    %v462 = vmax.f32 %v459, 0.0
    %v463 = vpack.c.bf16 %v462, %v462
    %v464 = vld [vmem:[#allocation11] sm:$0xf]
    %v465 = vld [vmem:[#allocation11 + $0x4] sm:$0xf]
    %v466 = vld [vmem:[#allocation11 + $0x8] sm:$0xf]
    %v467 = vld [vmem:[#allocation11 + $0xc] sm:$0xf]
    %v468 = vld [vmem:[#allocation11 + $0x10] sm:$0xf]
    %v469 = vld [vmem:[#allocation11 + $0x14] sm:$0xf]
    %v470 = vld [vmem:[#allocation11 + $0x18] sm:$0xf]
    %v471 = vld [vmem:[#allocation11 + $0x1c] sm:$0xf]
    %v472 = vld [vmem:[#allocation11 + $0x20] sm:$0xf]
    %v473 = vld [vmem:[#allocation11 + $0x24] sm:$0xf]
    %v474 = vld [vmem:[#allocation11 + $0x28] sm:$0xf]
    %v475 = vld [vmem:[#allocation11 + $0x2c] sm:$0xf]
    %v476 = vld [vmem:[#allocation11 + $0x30] sm:$0xf]
    %v477 = vld [vmem:[#allocation11 + $0x34] sm:$0xf]
    %v478 = vld [vmem:[#allocation11 + $0x38] sm:$0xf]
    %v479 = vld [vmem:[#allocation11 + $0x3c] sm:$0xf]
    %v480 = vld [vmem:[%s10] sm:$0x1]
    %v482 = vperm.slane %v480, 0
    %v500 = vunpack.c.l.b16 %v464
    %v501 = vunpack.c.l.b16 %v465
    %v502 = vunpack.c.l.b16 %v466
    %v503 = vunpack.c.l.b16 %v467
    %v504 = vunpack.c.l.b16 %v468
    %v505 = vunpack.c.l.b16 %v469
    %v506 = vunpack.c.l.b16 %v470
    %v507 = vunpack.c.l.b16 %v471
    %v508 = vunpack.c.l.b16 %v472
    %v509 = vunpack.c.l.b16 %v473
    %v510 = vunpack.c.l.b16 %v474
    %v511 = vunpack.c.l.b16 %v475
    %v512 = vunpack.c.l.b16 %v476
    %v513 = vunpack.c.l.b16 %v477
    %v514 = vunpack.c.l.b16 %v478
    %v515 = vunpack.c.l.b16 %v479
    %v516 = vpack.c.b16 %v501, %v500
    %v517 = vpack.c.b16 %v503, %v502
    %v518 = vpack.c.b16 %v505, %v504
    %v519 = vpack.c.b16 %v507, %v506
    %v520 = vpack.c.b16 %v509, %v508
    %v521 = vpack.c.b16 %v511, %v510
    %v522 = vpack.c.b16 %v513, %v512
    %v523 = vpack.c.b16 %v515, %v514
    %532 = vmatpush.bf16.msra.mxu0 %v523
    %533 = vmatpush.bf16.msra.mxu0 %v522
    %534 = vmatpush.bf16.msra.mxu0 %v521
    %535 = vmatpush.bf16.msra.mxu0 %v520
    %536 = vmatpush.bf16.msra.mxu0 %v519
    %537 = vmatpush.bf16.msra.mxu0 %v518
    %538 = vmatpush.bf16.msra.mxu0 %v517
    %539 = vmatpush.bf16.msra.mxu0 %v516
    %540 = vmatmul.bf16.gmra.mxu0 %v463
    %v541 = vpop.f32.mrf.mxu0
    %v542 = vadd.f32 %v482, %v541
    %v543 = vpop.f32.mrf.mxu0
    %544 = vdwg.mxu0
    %v545 = vmax.f32 %v542, 0.0
    %v546 = vpack.c.bf16 %v545, %v545
    %v547 = vld [vmem:[#allocation13] sm:$0xf]
    %v548 = vld [vmem:[#allocation13 + $0x4] sm:$0xf]
    %v549 = vld [vmem:[#allocation13 + $0x8] sm:$0xf]
    %v550 = vld [vmem:[#allocation13 + $0xc] sm:$0xf]
    %v551 = vld [vmem:[#allocation13 + $0x10] sm:$0xf]
    %v552 = vld [vmem:[#allocation13 + $0x14] sm:$0xf]
    %v553 = vld [vmem:[#allocation13 + $0x18] sm:$0xf]
    %v554 = vld [vmem:[#allocation13 + $0x1c] sm:$0xf]
    %v555 = vld [vmem:[#allocation13 + $0x20] sm:$0xf]
    %v556 = vld [vmem:[#allocation13 + $0x24] sm:$0xf]
    %v557 = vld [vmem:[#allocation13 + $0x28] sm:$0xf]
    %v558 = vld [vmem:[#allocation13 + $0x2c] sm:$0xf]
    %v559 = vld [vmem:[#allocation13 + $0x30] sm:$0xf]
    %v560 = vld [vmem:[#allocation13 + $0x34] sm:$0xf]
    %v561 = vld [vmem:[#allocation13 + $0x38] sm:$0xf]
    %v562 = vld [vmem:[#allocation13 + $0x3c] sm:$0xf]
    %v563 = vld [vmem:[%s12] sm:$0x1]
    %v565 = vperm.slane %v563, 0
    %v583 = vunpack.c.l.b16 %v547
    %v584 = vunpack.c.l.b16 %v548
    %v585 = vunpack.c.l.b16 %v549
    %v586 = vunpack.c.l.b16 %v550
    %v587 = vunpack.c.l.b16 %v551
    %v588 = vunpack.c.l.b16 %v552
    %v589 = vunpack.c.l.b16 %v553
    %v590 = vunpack.c.l.b16 %v554
    %v591 = vunpack.c.l.b16 %v555
    %v592 = vunpack.c.l.b16 %v556
    %v593 = vunpack.c.l.b16 %v557
    %v594 = vunpack.c.l.b16 %v558
    %v595 = vunpack.c.l.b16 %v559
    %v596 = vunpack.c.l.b16 %v560
    %v597 = vunpack.c.l.b16 %v561
    %v598 = vunpack.c.l.b16 %v562
    %v599 = vpack.c.b16 %v584, %v583
    %v600 = vpack.c.b16 %v586, %v585
    %v601 = vpack.c.b16 %v588, %v587
    %v602 = vpack.c.b16 %v590, %v589
    %v603 = vpack.c.b16 %v592, %v591
    %v604 = vpack.c.b16 %v594, %v593
    %v605 = vpack.c.b16 %v596, %v595
    %v606 = vpack.c.b16 %v598, %v597
    %615 = vmatpush.bf16.msra.mxu0 %v606
    %616 = vmatpush.bf16.msra.mxu0 %v605
    %617 = vmatpush.bf16.msra.mxu0 %v604
    %618 = vmatpush.bf16.msra.mxu0 %v603
    %619 = vmatpush.bf16.msra.mxu0 %v602
    %620 = vmatpush.bf16.msra.mxu0 %v601
    %621 = vmatpush.bf16.msra.mxu0 %v600
    %622 = vmatpush.bf16.msra.mxu0 %v599
    %623 = vmatmul.bf16.gmra.mxu0 %v546
    %v624 = vpop.f32.mrf.mxu0
    %v625 = vadd.f32 %v565, %v624
    %v626 = vpop.f32.mrf.mxu0
    %627 = vdwg.mxu0
    %v628 = vmax.f32 %v625, 0.0
    %v629 = vpack.c.bf16 %v628, %v628
    %v630 = vld [vmem:[#allocation14] sm:$0xf]
    %v631 = vld [vmem:[#allocation14 + $0x4] sm:$0xf]
    %v632 = vld [vmem:[#allocation14 + $0x8] sm:$0xf]
    %v633 = vld [vmem:[#allocation14 + $0xc] sm:$0xf]
    %v634 = vld [vmem:[#allocation14 + $0x10] sm:$0xf]
    %v635 = vld [vmem:[#allocation14 + $0x14] sm:$0xf]
    %v636 = vld [vmem:[#allocation14 + $0x18] sm:$0xf]
    %v637 = vld [vmem:[#allocation14 + $0x1c] sm:$0xf]
    %v638 = vld [vmem:[#allocation14 + $0x20] sm:$0xf]
    %v639 = vld [vmem:[#allocation14 + $0x24] sm:$0xf]
    %v640 = vld [vmem:[#allocation14 + $0x28] sm:$0xf]
    %v641 = vld [vmem:[#allocation14 + $0x2c] sm:$0xf]
    %v642 = vld [vmem:[#allocation14 + $0x30] sm:$0xf]
    %v643 = vld [vmem:[#allocation14 + $0x34] sm:$0xf]
    %v644 = vld [vmem:[#allocation14 + $0x38] sm:$0xf]
    %v645 = vld [vmem:[#allocation14 + $0x3c] sm:$0xf]
    %v646 = vld [vmem:[%s14] sm:$0x1]
    %v648 = vperm.slane %v646, 0
    %v666 = vunpack.c.l.b16 %v630
    %v667 = vunpack.c.l.b16 %v631
    %v668 = vunpack.c.l.b16 %v632
    %v669 = vunpack.c.l.b16 %v633
    %v670 = vunpack.c.l.b16 %v634
    %v671 = vunpack.c.l.b16 %v635
    %v672 = vunpack.c.l.b16 %v636
    %v673 = vunpack.c.l.b16 %v637
    %v674 = vunpack.c.l.b16 %v638
    %v675 = vunpack.c.l.b16 %v639
    %v676 = vunpack.c.l.b16 %v640
    %v677 = vunpack.c.l.b16 %v641
    %v678 = vunpack.c.l.b16 %v642
    %v679 = vunpack.c.l.b16 %v643
    %v680 = vunpack.c.l.b16 %v644
    %v681 = vunpack.c.l.b16 %v645
    %v682 = vpack.c.b16 %v667, %v666
    %v683 = vpack.c.b16 %v669, %v668
    %v684 = vpack.c.b16 %v671, %v670
    %v685 = vpack.c.b16 %v673, %v672
    %v686 = vpack.c.b16 %v675, %v674
    %v687 = vpack.c.b16 %v677, %v676
    %v688 = vpack.c.b16 %v679, %v678
    %v689 = vpack.c.b16 %v681, %v680
    %698 = vmatpush.bf16.msra.mxu0 %v689
    %699 = vmatpush.bf16.msra.mxu0 %v688
    %700 = vmatpush.bf16.msra.mxu0 %v687
    %701 = vmatpush.bf16.msra.mxu0 %v686
    %702 = vmatpush.bf16.msra.mxu0 %v685
    %703 = vmatpush.bf16.msra.mxu0 %v684
    %704 = vmatpush.bf16.msra.mxu0 %v683
    %705 = vmatpush.bf16.msra.mxu0 %v682
    %706 = vmatmul.bf16.gmra.mxu0 %v629
    %v707 = vpop.f32.mrf.mxu0
    %v708 = vadd.f32 %v648, %v707
    %v709 = vpop.f32.mrf.mxu0
    %710 = vdwg.mxu0
    %711 = vst [vmem:[#allocation16] sm:$0xff] %v708
    // Predicated region
    $region94: #{tpu_custom_call.1} parent=1 // pred_check
      _
    $region95: #{tpu_custom_call.1} parent=1 // pred_check_branch
      %713 = sbr.rel (0) target = $region97
    $region96: #{tpu_custom_call.1} parent=1 // pred_region
      %715 = vsyncadd [#allocation4], 0
      %s717 = sshll.u32 [#allocation16], 4
      %s718 = int_to_ptr.vmem [resolvable:$true] %s717
      %s719 = sshll.u32 %s15, 4
      %s720 = int_to_ptr.hbm [resolvable:$true] %s719
      %722 = dma.vmem_to_hbm [thread:$0]  %s718, 128, %s720, [#allocation4]
    $region97: #{tpu_custom_call.1} parent=1 // pred_fallthru
      _
    // Predicated region
    $region98: #{tpu_custom_call.1} parent=1 // pred_check
      _
    $region99: #{tpu_custom_call.1} parent=1 // pred_check_branch
      %724 = sbr.rel (0) target = $region101
    $region100: #{tpu_custom_call.1} parent=1 // pred_region
      %726 = dma.done [#allocation4], 128
    $region101: #{tpu_custom_call.1} parent=1 // pred_fallthru
      _
    %727 = vsyncpa [#allocation3], 1
    %728 = vsyncpa [#allocation6], 1
    %729 = vsyncpa [#allocation9], 1
    %730 = vsyncpa [#allocation12], 1
    %731 = vsyncpa [#allocation15], 1
    %732 = vsyncpa [#allocation4], 1

</llo_original>
